<compile_context>
chip_gen: v7x
topology: tpu7x:2x2x1
jax: 0.10.0
libtpu: 0.0.40
codegen_flags: <defaults>
</compile_context>

<pallas_src>
import functools

import jax
import jax.numpy as jnp
from jax.experimental import pallas as pl
from jax.experimental.pallas import tpu as pltpu

_LANE = 128


def _round_up(n, m):
    return ((n + m - 1) // m) * m


def _has_bf16_eup():
    """True on chips with a bf16 VPU/EUP path (v6e, v7x); False on v5e/older."""
    try:
        kind = jax.devices()[0].device_kind.lower()
    except Exception:  # pragma: no cover - CPU/interpret fallback
        return False
    for old in ("v2", "v3", "v4", "v5"):
        if old in kind:
            return False
    return True


def _encoder_kernel(x_ref, wih_ref, whh_ref, b_ref, wfc_ref, bfc_ref, out_ref,
                    *, B, T, bf16_tanh):
    """Gridless kernel: full RNN recurrence + final Linear in one invocation.

    x_ref   : (T*B, I)  bf16, TIME-major rows (row t*B + b is x[b, t])
    wih_ref : (I,  Hp)  bf16, W_ih^T zero-padded to Hp (=128) lanes
    whh_ref : (Hp, Hp)  bf16, W_hh^T zero-padded
    b_ref   : (1,  Hp)  f32,  b_ih + b_hh zero-padded
    wfc_ref : (Hp, Lp)  bf16, W_fc^T zero-padded
    bfc_ref : (1,  Lp)  f32,  b_fc zero-padded
    out_ref : (B,  Lp)  f32,  lane-dense padded output
    """
    Hp = whh_ref.shape[1]

    # Hoisted input projection: one MXU matmul covering all time steps, with
    # the fused RNN bias folded in. Off the serial chain.
    xw = jnp.dot(x_ref[...], wih_ref[...],
                 preferred_element_type=jnp.float32) + b_ref[...]   # (T*B, Hp)

    # Load the recurrent weight once; 128x128 bf16 = 8 vregs, stays resident
    # across the whole unrolled loop.
    whh = whh_ref[...]
    mm_dtype = whh.dtype

    # Fully-unrolled recurrence; h carried as a value (vregs). Matmul inputs
    # in bf16 with f32 accumulation. Per-step input is a contiguous static
    # slice (time-major layout), independent of h -> off the critical path.
    h = jnp.zeros((B, Hp), mm_dtype)
    for t in range(T):
        pre = xw[t * B:(t + 1) * B, :] + jnp.dot(
            h, whh, preferred_element_type=jnp.float32)
        if bf16_tanh:
            # bf16 EUP path (v6e/v7x): drop the per-step f32->bf16 cast from
            # the serial chain; tanh directly in bf16.
            h = jnp.tanh(pre.astype(jnp.bfloat16))
        else:
            # v5e and older: f32 tanh (no bf16 VPU/EUP), then cast for the MXU.
            h = jnp.tanh(pre).astype(mm_dtype)

    # Epilogue: final Linear, computed once after the loop.
    out = jnp.dot(h, wfc_ref[...],
                  preferred_element_type=jnp.float32) + bfc_ref[...]
    out_ref[...] = out.astype(out_ref.dtype)


def prepare_encoder_params(w_ih, w_hh, b_ih, b_hh, w_fc, b_fc):
    """One-time glue: pad/transpose/cast weights to kernel layouts.

    Call once at init; the per-call jitted forward takes the result directly,
    so none of these zeros/at[].set/cast ops sit on the per-call path.
    """
    H = w_hh.shape[0]
    I = w_ih.shape[1]
    L = w_fc.shape[0]
    Hp = _round_up(H, _LANE)
    Lp = _round_up(L, _LANE)

    wih_p = jnp.zeros((I, Hp), jnp.bfloat16).at[:, :H].set(
        w_ih.T.astype(jnp.bfloat16))
    whh_p = jnp.zeros((Hp, Hp), jnp.bfloat16).at[:H, :H].set(
        w_hh.T.astype(jnp.bfloat16))
    b_p = jnp.zeros((1, Hp), jnp.float32).at[0, :H].set(
        (b_ih + b_hh).astype(jnp.float32))
    wfc_p = jnp.zeros((Hp, Lp), jnp.bfloat16).at[:H, :L].set(
        w_fc.T.astype(jnp.bfloat16))
    bfc_p = jnp.zeros((1, Lp), jnp.float32).at[0, :L].set(
        b_fc.astype(jnp.float32))
    params = (wih_p, whh_p, b_p, wfc_p, bfc_p)
    return jax.tree_util.tree_map(jax.block_until_ready, params), L


@functools.partial(jax.jit, static_argnames=("L", "bf16_tanh"))
def encoder_forward(x_btI, params, *, L, bf16_tanh):
    """x_btI: (B, T, I) batch_first input (like the PyTorch module).

    params: tuple from prepare_encoder_params (padded/cast weights).
    """
    wih_p, whh_p, b_p, wfc_p, bfc_p = params
    B, T, I = x_btI.shape
    Lp = wfc_p.shape[1]

    # Per-call glue (fused under jit): tiny time-major transpose + bf16 cast.
    # Time-major rows let the kernel slice each step's batch contiguously.
    x_flat = x_btI.transpose(1, 0, 2).reshape(T * B, I).astype(jnp.bfloat16)

    kernel = functools.partial(_encoder_kernel, B=B, T=T, bf16_tanh=bf16_tanh)
    vmem = pl.BlockSpec(memory_space=pltpu.MemorySpace.VMEM)

    # Gridless, all-VMEM, no tiling: total resident data is tens of KiB, so
    # there is nothing to pipeline. Only add a leading "parallel" batch grid
    # axis (v7x, 2 TCs) once B per core is >= 8 rows (a full sublane granule).
    out_p = pl.pallas_call(
        kernel,
        out_shape=jax.ShapeDtypeStruct((B, Lp), jnp.float32),
        in_specs=[vmem] * 6,
        out_specs=vmem,
    )(x_flat, wih_p, whh_p, b_p, wfc_p, bfc_p)

    return out_p[:, :L]


def encoder_reference(x_btI, w_ih, w_hh, b_ih, b_hh, w_fc, b_fc):
    """Pure-JAX f32 reference of the same forward pass."""
    B, T, I = x_btI.shape
    H = w_hh.shape[0]
    h = jnp.zeros((B, H), jnp.float32)
    for t in range(T):
        h = jnp.tanh(x_btI[:, t, :] @ w_ih.T + b_ih + h @ w_hh.T + b_hh)
    return h @ w_fc.T + b_fc


if __name__ == "__main__":
    # Shapes implied by the module:
    #   input_size = data_note_high - data_note_low + 1 = 16
    #   cmp_enc_rnn_hidden_size = 32, cmp_hidden_size = 32
    B, T, I, H, L = 2, 8, 16, 32, 32

    key = jax.random.PRNGKey(0)
    k = jax.random.split(key, 7)
    x = jax.random.normal(k[0], (B, T, I), jnp.float32)          # piano-roll batch
    w_ih = jax.random.normal(k[1], (H, I), jnp.float32) * 0.1
    w_hh = jax.random.normal(k[2], (H, H), jnp.float32) * 0.1
    b_ih = jax.random.normal(k[3], (H,), jnp.float32) * 0.1
    b_hh = jax.random.normal(k[4], (H,), jnp.float32) * 0.1
    w_fc = jax.random.normal(k[5], (L, H), jnp.float32) * 0.1
    b_fc = jax.random.normal(k[6], (L,), jnp.float32) * 0.1

    # One-time weight preparation (hoisted out of the per-call path).
    params, latent = prepare_encoder_params(w_ih, w_hh, b_ih, b_hh, w_fc, b_fc)
    bf16_tanh = _has_bf16_eup()

    out = jax.block_until_ready(
        encoder_forward(x, params, L=latent, bf16_tanh=bf16_tanh))
    ref = encoder_reference(x, w_ih, w_hh, b_ih, b_hh, w_fc, b_fc)

    assert out.shape == (B, L)
    # bf16 MXU operands / bf16 tanh (f32 accumulate) vs pure-f32 ref -> loose tol.
    assert jnp.allclose(out, ref, atol=5e-2, rtol=5e-2), float(
        jnp.max(jnp.abs(out - ref)))

    print("KERNEL_OK")
</pallas_src>

<mosaic_0001>
module attributes {stable_mosaic.version = 11 : i64} {
  func.func @_encoder_kernel(%arg0: memref<16x16xbf16, #tpu.memory_space<vmem>>, %arg1: memref<16x128xbf16, #tpu.memory_space<vmem>>, %arg2: memref<128x128xbf16, #tpu.memory_space<vmem>>, %arg3: memref<1x128xf32, #tpu.memory_space<vmem>>, %arg4: memref<128x128xbf16, #tpu.memory_space<vmem>>, %arg5: memref<1x128xf32, #tpu.memory_space<vmem>>, %arg6: memref<2x128xf32, #tpu.memory_space<vmem>>) attributes {dimension_semantics = [], scalar_prefetch = 0 : i64, scratch_operands = 0 : i64, tpu.core_type = #tpu.core_type<tc>} {
    %c0 = arith.constant 0 : index
    %c0_0 = arith.constant 0 : index
    %0 = vector.load %arg0[%c0, %c0_0] : memref<16x16xbf16, #tpu.memory_space<vmem>>, vector<16x16xbf16>
    %c0_1 = arith.constant 0 : index
    %c0_2 = arith.constant 0 : index
    %1 = vector.load %arg1[%c0_1, %c0_2] : memref<16x128xbf16, #tpu.memory_space<vmem>>, vector<16x128xbf16>
    %cst = arith.constant dense<0.000000e+00> : vector<16x128xf32>
    %2 = tpu.matmul %0, %1, %cst {dimension_numbers = #tpu.dot_dimension_numbers<[1], [0], [0], [1], [0, 0, 1, 1], [], []>} : vector<16x16xbf16>, vector<16x128xbf16>, vector<16x128xf32> -> vector<16x128xf32>
    %c0_3 = arith.constant 0 : index
    %c0_4 = arith.constant 0 : index
    %3 = vector.load %arg3[%c0_3, %c0_4] : memref<1x128xf32, #tpu.memory_space<vmem>>, vector<1x128xf32>
    %4 = vector.broadcast %3 : vector<1x128xf32> to vector<16x128xf32>
    %5 = arith.addf %2, %4 : vector<16x128xf32>
    %c0_5 = arith.constant 0 : index
    %c0_6 = arith.constant 0 : index
    %6 = vector.load %arg2[%c0_5, %c0_6] : memref<128x128xbf16, #tpu.memory_space<vmem>>, vector<128x128xbf16>
    %cst_7 = arith.constant 0.000000e+00 : bf16
    %7 = vector.broadcast %cst_7 : bf16 to vector<2x128xbf16>
    %8 = vector.extract_strided_slice %5 {offsets = [0, 0], sizes = [2, 128], strides = [1, 1]} : vector<16x128xf32> to vector<2x128xf32>
    %cst_8 = arith.constant dense<0.000000e+00> : vector<2x128xf32>
    %9 = tpu.matmul %7, %6, %cst_8 {dimension_numbers = #tpu.dot_dimension_numbers<[1], [0], [0], [1], [0, 0, 1, 1], [], []>} : vector<2x128xbf16>, vector<128x128xbf16>, vector<2x128xf32> -> vector<2x128xf32>
    %10 = arith.addf %8, %9 : vector<2x128xf32>
    %11 = arith.truncf %10 : vector<2x128xf32> to vector<2x128xbf16>
    %12 = math.tanh %11 : vector<2x128xbf16>
    %13 = vector.extract_strided_slice %5 {offsets = [2, 0], sizes = [2, 128], strides = [1, 1]} : vector<16x128xf32> to vector<2x128xf32>
    %cst_9 = arith.constant dense<0.000000e+00> : vector<2x128xf32>
    %14 = tpu.matmul %12, %6, %cst_9 {dimension_numbers = #tpu.dot_dimension_numbers<[1], [0], [0], [1], [0, 0, 1, 1], [], []>} : vector<2x128xbf16>, vector<128x128xbf16>, vector<2x128xf32> -> vector<2x128xf32>
    %15 = arith.addf %13, %14 : vector<2x128xf32>
    %16 = arith.truncf %15 : vector<2x128xf32> to vector<2x128xbf16>
    %17 = math.tanh %16 : vector<2x128xbf16>
    %18 = vector.extract_strided_slice %5 {offsets = [4, 0], sizes = [2, 128], strides = [1, 1]} : vector<16x128xf32> to vector<2x128xf32>
    %cst_10 = arith.constant dense<0.000000e+00> : vector<2x128xf32>
    %19 = tpu.matmul %17, %6, %cst_10 {dimension_numbers = #tpu.dot_dimension_numbers<[1], [0], [0], [1], [0, 0, 1, 1], [], []>} : vector<2x128xbf16>, vector<128x128xbf16>, vector<2x128xf32> -> vector<2x128xf32>
    %20 = arith.addf %18, %19 : vector<2x128xf32>
    %21 = arith.truncf %20 : vector<2x128xf32> to vector<2x128xbf16>
    %22 = math.tanh %21 : vector<2x128xbf16>
    %23 = vector.extract_strided_slice %5 {offsets = [6, 0], sizes = [2, 128], strides = [1, 1]} : vector<16x128xf32> to vector<2x128xf32>
    %cst_11 = arith.constant dense<0.000000e+00> : vector<2x128xf32>
    %24 = tpu.matmul %22, %6, %cst_11 {dimension_numbers = #tpu.dot_dimension_numbers<[1], [0], [0], [1], [0, 0, 1, 1], [], []>} : vector<2x128xbf16>, vector<128x128xbf16>, vector<2x128xf32> -> vector<2x128xf32>
    %25 = arith.addf %23, %24 : vector<2x128xf32>
    %26 = arith.truncf %25 : vector<2x128xf32> to vector<2x128xbf16>
    %27 = math.tanh %26 : vector<2x128xbf16>
    %28 = vector.extract_strided_slice %5 {offsets = [8, 0], sizes = [2, 128], strides = [1, 1]} : vector<16x128xf32> to vector<2x128xf32>
    %cst_12 = arith.constant dense<0.000000e+00> : vector<2x128xf32>
    %29 = tpu.matmul %27, %6, %cst_12 {dimension_numbers = #tpu.dot_dimension_numbers<[1], [0], [0], [1], [0, 0, 1, 1], [], []>} : vector<2x128xbf16>, vector<128x128xbf16>, vector<2x128xf32> -> vector<2x128xf32>
    %30 = arith.addf %28, %29 : vector<2x128xf32>
    %31 = arith.truncf %30 : vector<2x128xf32> to vector<2x128xbf16>
    %32 = math.tanh %31 : vector<2x128xbf16>
    %33 = vector.extract_strided_slice %5 {offsets = [10, 0], sizes = [2, 128], strides = [1, 1]} : vector<16x128xf32> to vector<2x128xf32>
    %cst_13 = arith.constant dense<0.000000e+00> : vector<2x128xf32>
    %34 = tpu.matmul %32, %6, %cst_13 {dimension_numbers = #tpu.dot_dimension_numbers<[1], [0], [0], [1], [0, 0, 1, 1], [], []>} : vector<2x128xbf16>, vector<128x128xbf16>, vector<2x128xf32> -> vector<2x128xf32>
    %35 = arith.addf %33, %34 : vector<2x128xf32>
    %36 = arith.truncf %35 : vector<2x128xf32> to vector<2x128xbf16>
    %37 = math.tanh %36 : vector<2x128xbf16>
    %38 = vector.extract_strided_slice %5 {offsets = [12, 0], sizes = [2, 128], strides = [1, 1]} : vector<16x128xf32> to vector<2x128xf32>
    %cst_14 = arith.constant dense<0.000000e+00> : vector<2x128xf32>
    %39 = tpu.matmul %37, %6, %cst_14 {dimension_numbers = #tpu.dot_dimension_numbers<[1], [0], [0], [1], [0, 0, 1, 1], [], []>} : vector<2x128xbf16>, vector<128x128xbf16>, vector<2x128xf32> -> vector<2x128xf32>
    %40 = arith.addf %38, %39 : vector<2x128xf32>
    %41 = arith.truncf %40 : vector<2x128xf32> to vector<2x128xbf16>
    %42 = math.tanh %41 : vector<2x128xbf16>
    %43 = vector.extract_strided_slice %5 {offsets = [14, 0], sizes = [2, 128], strides = [1, 1]} : vector<16x128xf32> to vector<2x128xf32>
    %cst_15 = arith.constant dense<0.000000e+00> : vector<2x128xf32>
    %44 = tpu.matmul %42, %6, %cst_15 {dimension_numbers = #tpu.dot_dimension_numbers<[1], [0], [0], [1], [0, 0, 1, 1], [], []>} : vector<2x128xbf16>, vector<128x128xbf16>, vector<2x128xf32> -> vector<2x128xf32>
    %45 = arith.addf %43, %44 : vector<2x128xf32>
    %46 = arith.truncf %45 : vector<2x128xf32> to vector<2x128xbf16>
    %47 = math.tanh %46 : vector<2x128xbf16>
    %c0_16 = arith.constant 0 : index
    %c0_17 = arith.constant 0 : index
    %48 = vector.load %arg4[%c0_16, %c0_17] : memref<128x128xbf16, #tpu.memory_space<vmem>>, vector<128x128xbf16>
    %cst_18 = arith.constant dense<0.000000e+00> : vector<2x128xf32>
    %49 = tpu.matmul %47, %48, %cst_18 {dimension_numbers = #tpu.dot_dimension_numbers<[1], [0], [0], [1], [0, 0, 1, 1], [], []>} : vector<2x128xbf16>, vector<128x128xbf16>, vector<2x128xf32> -> vector<2x128xf32>
    %c0_19 = arith.constant 0 : index
    %c0_20 = arith.constant 0 : index
    %50 = vector.load %arg5[%c0_19, %c0_20] : memref<1x128xf32, #tpu.memory_space<vmem>>, vector<1x128xf32>
    %51 = vector.broadcast %50 : vector<1x128xf32> to vector<2x128xf32>
    %52 = arith.addf %49, %51 : vector<2x128xf32>
    %c0_21 = arith.constant 0 : index
    %c0_22 = arith.constant 0 : index
    %53 = vector.load %arg6[%c0_21, %c0_22] : memref<2x128xf32, #tpu.memory_space<vmem>>, vector<2x128xf32>
    tpu.vector_store %arg6[%c0_21, %c0_22], %52 {strides = array<i32>} : memref<2x128xf32, #tpu.memory_space<vmem>>, vector<2x128xf32>,
    return
  }
}

</mosaic_0001>

<llo_original>
// kernel: encoder_forward.1
$region0: #{encoder_forward.1}
  #allocation0 [shape = 'u32[]', space=smem, size = 0x4, offset = 0x4, fixed_abs, tag = 'smem constant byte address 0x4 - core index']
  #allocation1 [shape = 'u32[144,128]{1,0:T(1,128)}', space=vmem, size = 0x12000, scoped, tag = 'internal scratch']
  %s0 = inlined_call_operand.vmem [shape: bf16[16,16], index: 0, kind: input, shape index: {}]
  %s1 = inlined_call_operand.vmem [shape: bf16[16,128], index: 1, kind: input, shape index: {}]
  %s2 = inlined_call_operand.hbm [shape: bf16[128,128], index: 2, kind: input, shape index: {}]
  %s3 = inlined_call_operand.vmem [shape: f32[1,128], index: 3, kind: input, shape index: {}]
  %s4 = inlined_call_operand.hbm [shape: bf16[128,128], index: 4, kind: input, shape index: {}]
  %s5 = inlined_call_operand.vmem [shape: f32[1,128], index: 5, kind: input, shape index: {}]
  %s6 = inlined_call_operand.hbm [shape: f32[2,128], index: 6, kind: output, shape index: {}]
  %s7 = sld [smem:[#allocation0]]
  $region42: #{encoder_forward.1} parent=0
    _
  %s9 = ssub.s32 1, %s7
  %s10 = scalar_select 0, %s9, %s7
  $region1: #{encoder_forward.1} parent=0
    #allocation2 [shape = 'u8[32768]{0}', space=vmem, size = 0x8000, scoped, tag = 'input window, operand 2, single buffered']
    #allocation3 [shape = 's32[1]{0}', space=sflag, size = 0x4, scoped, tag = 'scoped memory for encoder_forward.1']
    #allocation4 [shape = 's32[1]{0}', space=sflag, size = 0x4, scoped, tag = 'scoped memory for encoder_forward.1']
    #allocation5 [shape = 'u8[32768]{0}', space=vmem, size = 0x8000, scoped, tag = 'input window, operand 4, single buffered']
    #allocation6 [shape = 's32[1]{0}', space=sflag, size = 0x4, scoped, tag = 'scoped memory for encoder_forward.1']
    #allocation7 [shape = 'u8[1024]{0}', space=vmem, size = 0x400, scoped, tag = 'output window, operand 0, single buffered']
    %11 = vsyncpa [#allocation3], 0
    %12 = vsyncpa [#allocation6], 0
    %13 = vsyncpa [#allocation4], 0
    // Predicated region
    $region2: #{encoder_forward.1} parent=1 // pred_check
      _
    $region3: #{encoder_forward.1} parent=1 // pred_check_branch
      %15 = sbr.rel (0) target = $region5
    $region4: #{encoder_forward.1} parent=1 // pred_region
      _
    $region5: #{encoder_forward.1} parent=1 // pred_fallthru
      _
    // Predicated region
    $region6: #{encoder_forward.1} parent=1 // pred_check
      _
    $region7: #{encoder_forward.1} parent=1 // pred_check_branch
      %17 = sbr.rel (0) target = $region9
    $region8: #{encoder_forward.1} parent=1 // pred_region
      _
    $region9: #{encoder_forward.1} parent=1 // pred_fallthru
      _
    // Predicated region
    $region10: #{encoder_forward.1} parent=1 // pred_check
      _
    $region11: #{encoder_forward.1} parent=1 // pred_check_branch
      %19 = sbr.rel (0) target = $region13
    $region12: #{encoder_forward.1} parent=1 // pred_region
      %s21 = ssub.s32 1024, 1024
      %22 = vsyncadd [#allocation3], %s21
      %s23 = sshll.u32 [#allocation2], 4
      %s24 = int_to_ptr.vmem [resolvable:$true] %s23
      %29 = dma.hbm_to_vmem [thread:$0]  %s2, 1024, %s24, [#allocation3], 64, 64, 4
    $region13: #{encoder_forward.1} parent=1 // pred_fallthru
      _
    // Predicated region
    $region14: #{encoder_forward.1} parent=1 // pred_check
      _
    $region15: #{encoder_forward.1} parent=1 // pred_check_branch
      %31 = sbr.rel (0) target = $region17
    $region16: #{encoder_forward.1} parent=1 // pred_region
      _
    $region17: #{encoder_forward.1} parent=1 // pred_fallthru
      _
    // Predicated region
    $region18: #{encoder_forward.1} parent=1 // pred_check
      _
    $region19: #{encoder_forward.1} parent=1 // pred_check_branch
      %33 = sbr.rel (0) target = $region21
    $region20: #{encoder_forward.1} parent=1 // pred_region
      %s35 = ssub.s32 1024, 1024
      %36 = vsyncadd [#allocation6], %s35
      %s37 = sshll.u32 [#allocation5], 4
      %s38 = int_to_ptr.vmem [resolvable:$true] %s37
      %43 = dma.hbm_to_vmem [thread:$0]  %s4, 1024, %s38, [#allocation6], 64, 64, 4
    $region21: #{encoder_forward.1} parent=1 // pred_fallthru
      _
    // Predicated region
    $region22: #{encoder_forward.1} parent=1 // pred_check
      _
    $region23: #{encoder_forward.1} parent=1 // pred_check_branch
      %45 = sbr.rel (0) target = $region25
    $region24: #{encoder_forward.1} parent=1 // pred_region
      _
    $region25: #{encoder_forward.1} parent=1 // pred_fallthru
      _
    // Predicated region
    $region26: #{encoder_forward.1} parent=1 // pred_check
      _
    $region27: #{encoder_forward.1} parent=1 // pred_check_branch
      %47 = sbr.rel (0) target = $region29
    $region28: #{encoder_forward.1} parent=1 // pred_region
      %48 = dma.done [#allocation3], 1024
    $region29: #{encoder_forward.1} parent=1 // pred_fallthru
      _
    // Predicated region
    $region30: #{encoder_forward.1} parent=1 // pred_check
      _
    $region31: #{encoder_forward.1} parent=1 // pred_check_branch
      %50 = sbr.rel (0) target = $region33
    $region32: #{encoder_forward.1} parent=1 // pred_region
      %51 = dma.done [#allocation6], 1024
    $region33: #{encoder_forward.1} parent=1 // pred_fallthru
      _
    %v53 = vld [vmem:[%s0] sm:$0xf]
    %v54 = vld [vmem:[%s0 + $0x4] sm:$0xf]
    %v55 = vld [vmem:[%s1] sm:$0xf]
    %v56 = vld [vmem:[%s1 + $0x4] sm:$0xf]
    %v57 = vld [vmem:[%s3] sm:$0x1]
    %v59 = vlaneseq
    %v60 = vshrl.u32 %v59, 7
    %v61 = vsub.s32 0, %v60
    %v62 = vrot.slane %v57, %v61
    %v66 = vunpack.c.l.b16 %v53
    %v67 = vunpack.c.l.b16 %v54
    %v68 = vpack.c.b16 %v67, %v66
    %v71 = vunpack.c.l.b16 %v55
    %v72 = vunpack.c.l.b16 %v56
    %v73 = vpack.c.b16 %v72, %v71
    %vm75 = vcmask 130048
    %v77 = vsel %vm75, %v68, 0
    %79 = vmatprep.subr.bf16.mxu0 0
    %80 = vmatpush1.bf16.msra.mxu0 %v73
    %81 = vmatprep.subr.bf16.mxu0 0
    %82 = vmatpush1.bf16.msra.mxu0 0
    %83 = vmatprep.subr.bf16.mxu0 0
    %84 = vmatpush1.bf16.msra.mxu0 0
    %85 = vmatprep.subr.bf16.mxu0 0
    %86 = vmatpush1.bf16.msra.mxu0 0
    %87 = vmatprep.subr.bf16.mxu0 0
    %88 = vmatpush1.bf16.msra.mxu0 0
    %89 = vmatprep.subr.bf16.mxu0 0
    %90 = vmatpush1.bf16.msra.mxu0 0
    %91 = vmatprep.subr.bf16.mxu0 0
    %92 = vmatpush1.bf16.msra.mxu0 0
    %93 = vmatprep.subr.bf16.mxu0 0
    %94 = vmatpush1.bf16.msra.mxu0 0
    %95 = vmatprep.subr.bf16.mxu0 0
    %96 = vmatpush1.bf16.msra.mxu0 0
    %97 = vmatprep.subr.bf16.mxu0 0
    %98 = vmatpush1.bf16.msra.mxu0 0
    %99 = vmatprep.subr.bf16.mxu0 0
    %100 = vmatpush1.bf16.msra.mxu0 0
    %101 = vmatprep.subr.bf16.mxu0 0
    %102 = vmatpush1.bf16.msra.mxu0 0
    %103 = vmatprep.subr.bf16.mxu0 0
    %104 = vmatpush1.bf16.msra.mxu0 0
    %105 = vmatprep.subr.bf16.mxu0 0
    %106 = vmatpush1.bf16.msra.mxu0 0
    %107 = vmatprep.subr.bf16.mxu0 0
    %108 = vmatpush1.bf16.msra.mxu0 0
    %109 = vmatprep.subr.bf16.mxu0 0
    %110 = vmatpush1.bf16.msra.mxu0 0
    %111 = vmatprep.mubr.bf16.mxu0 0
    %112 = vmatmul.mubr.bf16.gmra.mrb[0].mxu0 %v77
    %v113 = vpop.f32.mrb[0].mxu0
    %v114 = vadd.f32 %v62, %v113
    %v115 = vpop.f32.mrb[0].mxu0
    %v116 = vpop.f32.mrb[0].mxu0
    %v117 = vadd.f32 %v62, %v116
    %v118 = vpop.f32.mrb[0].mxu0
    %119 = vdwg.mxu0
    %v120 = vld [vmem:[#allocation2] sm:$0xf]
    %v121 = vld [vmem:[#allocation2 + $0x4] sm:$0xf]
    %v122 = vld [vmem:[#allocation2 + $0x8] sm:$0xf]
    %v123 = vld [vmem:[#allocation2 + $0xc] sm:$0xf]
    %v124 = vld [vmem:[#allocation2 + $0x10] sm:$0xf]
    %v125 = vld [vmem:[#allocation2 + $0x14] sm:$0xf]
    %v126 = vld [vmem:[#allocation2 + $0x18] sm:$0xf]
    %v127 = vld [vmem:[#allocation2 + $0x1c] sm:$0xf]
    %v128 = vld [vmem:[#allocation2 + $0x20] sm:$0xf]
    %v129 = vld [vmem:[#allocation2 + $0x24] sm:$0xf]
    %v130 = vld [vmem:[#allocation2 + $0x28] sm:$0xf]
    %v131 = vld [vmem:[#allocation2 + $0x2c] sm:$0xf]
    %v132 = vld [vmem:[#allocation2 + $0x30] sm:$0xf]
    %v133 = vld [vmem:[#allocation2 + $0x34] sm:$0xf]
    %v134 = vld [vmem:[#allocation2 + $0x38] sm:$0xf]
    %v135 = vld [vmem:[#allocation2 + $0x3c] sm:$0xf]
    %v152 = vunpack.c.l.b16 %v120
    %v153 = vunpack.c.l.b16 %v121
    %v154 = vunpack.c.l.b16 %v122
    %v155 = vunpack.c.l.b16 %v123
    %v156 = vunpack.c.l.b16 %v124
    %v157 = vunpack.c.l.b16 %v125
    %v158 = vunpack.c.l.b16 %v126
    %v159 = vunpack.c.l.b16 %v127
    %v160 = vunpack.c.l.b16 %v128
    %v161 = vunpack.c.l.b16 %v129
    %v162 = vunpack.c.l.b16 %v130
    %v163 = vunpack.c.l.b16 %v131
    %v164 = vunpack.c.l.b16 %v132
    %v165 = vunpack.c.l.b16 %v133
    %v166 = vunpack.c.l.b16 %v134
    %v167 = vunpack.c.l.b16 %v135
    %v168 = vpack.c.b16 %v153, %v152
    %v169 = vpack.c.b16 %v155, %v154
    %v170 = vpack.c.b16 %v157, %v156
    %v171 = vpack.c.b16 %v159, %v158
    %v172 = vpack.c.b16 %v161, %v160
    %v173 = vpack.c.b16 %v163, %v162
    %v174 = vpack.c.b16 %v165, %v164
    %v175 = vpack.c.b16 %v167, %v166
    %184 = vmatprep.subr.bf16.mxu0 0
    %185 = vmatpush1.bf16.msra.mxu0 %v168
    %186 = vmatprep.subr.bf16.mxu0 0
    %187 = vmatpush1.bf16.msra.mxu0 %v169
    %188 = vmatprep.subr.bf16.mxu0 0
    %189 = vmatpush1.bf16.msra.mxu0 %v170
    %190 = vmatprep.subr.bf16.mxu0 0
    %191 = vmatpush1.bf16.msra.mxu0 %v171
    %192 = vmatprep.subr.bf16.mxu0 0
    %193 = vmatpush1.bf16.msra.mxu0 %v172
    %194 = vmatprep.subr.bf16.mxu0 0
    %195 = vmatpush1.bf16.msra.mxu0 %v173
    %196 = vmatprep.subr.bf16.mxu0 0
    %197 = vmatpush1.bf16.msra.mxu0 %v174
    %198 = vmatprep.subr.bf16.mxu0 0
    %199 = vmatpush1.bf16.msra.mxu0 %v175
    %200 = vmatprep.subr.bf16.mxu0 0
    %201 = vmatpush1.bf16.msra.mxu0 0
    %202 = vmatprep.subr.bf16.mxu0 0
    %203 = vmatpush1.bf16.msra.mxu0 0
    %204 = vmatprep.subr.bf16.mxu0 0
    %205 = vmatpush1.bf16.msra.mxu0 0
    %206 = vmatprep.subr.bf16.mxu0 0
    %207 = vmatpush1.bf16.msra.mxu0 0
    %208 = vmatprep.subr.bf16.mxu0 0
    %209 = vmatpush1.bf16.msra.mxu0 0
    %210 = vmatprep.subr.bf16.mxu0 0
    %211 = vmatpush1.bf16.msra.mxu0 0
    %212 = vmatprep.subr.bf16.mxu0 0
    %213 = vmatpush1.bf16.msra.mxu0 0
    %214 = vmatprep.subr.bf16.mxu0 0
    %215 = vmatpush1.bf16.msra.mxu0 0
    %216 = vmatprep.mubr.bf16.mxu0 0
    %217 = vmatmul.mubr.bf16.gmra.mrb[0].mxu0 0
    %v218 = vpop.f32.mrb[0].mxu0
    %v219 = vadd.f32 0.0, %v218
    %v220 = vpop.f32.mrb[0].mxu0
    %v221 = vpop.f32.mrb[0].mxu0
    %v222 = vpop.f32.mrb[0].mxu0
    %223 = vdwg.mxu0
    %v224 = vadd.f32 %v114, %v219
    %v225 = vpack.c.bf16 %v224, %v224
    %v226 = vtanh.bf16.pop %v225
    %227 = vmatprep.subr.bf16.mxu0 0
    %228 = vmatpush1.bf16.msra.mxu0 %v168
    %229 = vmatprep.subr.bf16.mxu0 0
    %230 = vmatpush1.bf16.msra.mxu0 %v169
    %231 = vmatprep.subr.bf16.mxu0 0
    %232 = vmatpush1.bf16.msra.mxu0 %v170
    %233 = vmatprep.subr.bf16.mxu0 0
    %234 = vmatpush1.bf16.msra.mxu0 %v171
    %235 = vmatprep.subr.bf16.mxu0 0
    %236 = vmatpush1.bf16.msra.mxu0 %v172
    %237 = vmatprep.subr.bf16.mxu0 0
    %238 = vmatpush1.bf16.msra.mxu0 %v173
    %239 = vmatprep.subr.bf16.mxu0 0
    %240 = vmatpush1.bf16.msra.mxu0 %v174
    %241 = vmatprep.subr.bf16.mxu0 0
    %242 = vmatpush1.bf16.msra.mxu0 %v175
    %243 = vmatprep.subr.bf16.mxu0 0
    %244 = vmatpush1.bf16.msra.mxu0 0
    %245 = vmatprep.subr.bf16.mxu0 0
    %246 = vmatpush1.bf16.msra.mxu0 0
    %247 = vmatprep.subr.bf16.mxu0 0
    %248 = vmatpush1.bf16.msra.mxu0 0
    %249 = vmatprep.subr.bf16.mxu0 0
    %250 = vmatpush1.bf16.msra.mxu0 0
    %251 = vmatprep.subr.bf16.mxu0 0
    %252 = vmatpush1.bf16.msra.mxu0 0
    %253 = vmatprep.subr.bf16.mxu0 0
    %254 = vmatpush1.bf16.msra.mxu0 0
    %255 = vmatprep.subr.bf16.mxu0 0
    %256 = vmatpush1.bf16.msra.mxu0 0
    %257 = vmatprep.subr.bf16.mxu0 0
    %258 = vmatpush1.bf16.msra.mxu0 0
    %259 = vmatprep.mubr.bf16.mxu0 0
    %260 = vmatmul.mubr.bf16.gmra.mrb[0].mxu0 %v226
    %v261 = vpop.f32.mrb[0].mxu0
    %v262 = vadd.f32 0.0, %v261
    %v263 = vpop.f32.mrb[0].mxu0
    %v264 = vpop.f32.mrb[0].mxu0
    %v265 = vpop.f32.mrb[0].mxu0
    %266 = vdwg.mxu0
    %v268 = vrot.slane %v262, 6
    %v270 = vadd.f32 %v114, %v268
    %v271 = vpack.c.bf16 %v270, %v270
    %v272 = vtanh.bf16.pop %v271
    %v274 = vrot.slane %v272, 1
    %276 = vmatprep.subr.bf16.mxu0 0
    %277 = vmatpush1.bf16.msra.mxu0 %v168
    %278 = vmatprep.subr.bf16.mxu0 0
    %279 = vmatpush1.bf16.msra.mxu0 %v169
    %280 = vmatprep.subr.bf16.mxu0 0
    %281 = vmatpush1.bf16.msra.mxu0 %v170
    %282 = vmatprep.subr.bf16.mxu0 0
    %283 = vmatpush1.bf16.msra.mxu0 %v171
    %284 = vmatprep.subr.bf16.mxu0 0
    %285 = vmatpush1.bf16.msra.mxu0 %v172
    %286 = vmatprep.subr.bf16.mxu0 0
    %287 = vmatpush1.bf16.msra.mxu0 %v173
    %288 = vmatprep.subr.bf16.mxu0 0
    %289 = vmatpush1.bf16.msra.mxu0 %v174
    %290 = vmatprep.subr.bf16.mxu0 0
    %291 = vmatpush1.bf16.msra.mxu0 %v175
    %292 = vmatprep.subr.bf16.mxu0 0
    %293 = vmatpush1.bf16.msra.mxu0 0
    %294 = vmatprep.subr.bf16.mxu0 0
    %295 = vmatpush1.bf16.msra.mxu0 0
    %296 = vmatprep.subr.bf16.mxu0 0
    %297 = vmatpush1.bf16.msra.mxu0 0
    %298 = vmatprep.subr.bf16.mxu0 0
    %299 = vmatpush1.bf16.msra.mxu0 0
    %300 = vmatprep.subr.bf16.mxu0 0
    %301 = vmatpush1.bf16.msra.mxu0 0
    %302 = vmatprep.subr.bf16.mxu0 0
    %303 = vmatpush1.bf16.msra.mxu0 0
    %304 = vmatprep.subr.bf16.mxu0 0
    %305 = vmatpush1.bf16.msra.mxu0 0
    %306 = vmatprep.subr.bf16.mxu0 0
    %307 = vmatpush1.bf16.msra.mxu0 0
    %308 = vmatprep.mubr.bf16.mxu0 0
    %309 = vmatmul.mubr.bf16.gmra.mrb[0].mxu0 %v274
    %v310 = vpop.f32.mrb[0].mxu0
    %v311 = vadd.f32 0.0, %v310
    %v312 = vpop.f32.mrb[0].mxu0
    %v313 = vpop.f32.mrb[0].mxu0
    %v314 = vpop.f32.mrb[0].mxu0
    %315 = vdwg.mxu0
    %v317 = vrot.slane %v311, 4
    %v319 = vadd.f32 %v114, %v317
    %v320 = vpack.c.bf16 %v319, %v319
    %v321 = vtanh.bf16.pop %v320
    %v323 = vrot.slane %v321, 2
    %325 = vmatprep.subr.bf16.mxu0 0
    %326 = vmatpush1.bf16.msra.mxu0 %v168
    %327 = vmatprep.subr.bf16.mxu0 0
    %328 = vmatpush1.bf16.msra.mxu0 %v169
    %329 = vmatprep.subr.bf16.mxu0 0
    %330 = vmatpush1.bf16.msra.mxu0 %v170
    %331 = vmatprep.subr.bf16.mxu0 0
    %332 = vmatpush1.bf16.msra.mxu0 %v171
    %333 = vmatprep.subr.bf16.mxu0 0
    %334 = vmatpush1.bf16.msra.mxu0 %v172
    %335 = vmatprep.subr.bf16.mxu0 0
    %336 = vmatpush1.bf16.msra.mxu0 %v173
    %337 = vmatprep.subr.bf16.mxu0 0
    %338 = vmatpush1.bf16.msra.mxu0 %v174
    %339 = vmatprep.subr.bf16.mxu0 0
    %340 = vmatpush1.bf16.msra.mxu0 %v175
    %341 = vmatprep.subr.bf16.mxu0 0
    %342 = vmatpush1.bf16.msra.mxu0 0
    %343 = vmatprep.subr.bf16.mxu0 0
    %344 = vmatpush1.bf16.msra.mxu0 0
    %345 = vmatprep.subr.bf16.mxu0 0
    %346 = vmatpush1.bf16.msra.mxu0 0
    %347 = vmatprep.subr.bf16.mxu0 0
    %348 = vmatpush1.bf16.msra.mxu0 0
    %349 = vmatprep.subr.bf16.mxu0 0
    %350 = vmatpush1.bf16.msra.mxu0 0
    %351 = vmatprep.subr.bf16.mxu0 0
    %352 = vmatpush1.bf16.msra.mxu0 0
    %353 = vmatprep.subr.bf16.mxu0 0
    %354 = vmatpush1.bf16.msra.mxu0 0
    %355 = vmatprep.subr.bf16.mxu0 0
    %356 = vmatpush1.bf16.msra.mxu0 0
    %357 = vmatprep.mubr.bf16.mxu0 0
    %358 = vmatmul.mubr.bf16.gmra.mrb[0].mxu0 %v323
    %v359 = vpop.f32.mrb[0].mxu0
    %v360 = vadd.f32 0.0, %v359
    %v361 = vpop.f32.mrb[0].mxu0
    %v362 = vpop.f32.mrb[0].mxu0
    %v363 = vpop.f32.mrb[0].mxu0
    %364 = vdwg.mxu0
    %v366 = vrot.slane %v360, 2
    %v368 = vadd.f32 %v114, %v366
    %v369 = vpack.c.bf16 %v368, %v368
    %v370 = vtanh.bf16.pop %v369
    %v372 = vrot.slane %v370, 3
    %374 = vmatprep.subr.bf16.mxu0 0
    %375 = vmatpush1.bf16.msra.mxu0 %v168
    %376 = vmatprep.subr.bf16.mxu0 0
    %377 = vmatpush1.bf16.msra.mxu0 %v169
    %378 = vmatprep.subr.bf16.mxu0 0
    %379 = vmatpush1.bf16.msra.mxu0 %v170
    %380 = vmatprep.subr.bf16.mxu0 0
    %381 = vmatpush1.bf16.msra.mxu0 %v171
    %382 = vmatprep.subr.bf16.mxu0 0
    %383 = vmatpush1.bf16.msra.mxu0 %v172
    %384 = vmatprep.subr.bf16.mxu0 0
    %385 = vmatpush1.bf16.msra.mxu0 %v173
    %386 = vmatprep.subr.bf16.mxu0 0
    %387 = vmatpush1.bf16.msra.mxu0 %v174
    %388 = vmatprep.subr.bf16.mxu0 0
    %389 = vmatpush1.bf16.msra.mxu0 %v175
    %390 = vmatprep.subr.bf16.mxu0 0
    %391 = vmatpush1.bf16.msra.mxu0 0
    %392 = vmatprep.subr.bf16.mxu0 0
    %393 = vmatpush1.bf16.msra.mxu0 0
    %394 = vmatprep.subr.bf16.mxu0 0
    %395 = vmatpush1.bf16.msra.mxu0 0
    %396 = vmatprep.subr.bf16.mxu0 0
    %397 = vmatpush1.bf16.msra.mxu0 0
    %398 = vmatprep.subr.bf16.mxu0 0
    %399 = vmatpush1.bf16.msra.mxu0 0
    %400 = vmatprep.subr.bf16.mxu0 0
    %401 = vmatpush1.bf16.msra.mxu0 0
    %402 = vmatprep.subr.bf16.mxu0 0
    %403 = vmatpush1.bf16.msra.mxu0 0
    %404 = vmatprep.subr.bf16.mxu0 0
    %405 = vmatpush1.bf16.msra.mxu0 0
    %406 = vmatprep.mubr.bf16.mxu0 0
    %407 = vmatmul.mubr.bf16.gmra.mrb[0].mxu0 %v372
    %v408 = vpop.f32.mrb[0].mxu0
    %v409 = vadd.f32 0.0, %v408
    %v410 = vpop.f32.mrb[0].mxu0
    %v411 = vpop.f32.mrb[0].mxu0
    %v412 = vpop.f32.mrb[0].mxu0
    %413 = vdwg.mxu0
    %v414 = vadd.f32 %v117, %v409
    %v415 = vpack.c.bf16 %v414, %v414
    %v416 = vtanh.bf16.pop %v415
    %417 = vmatprep.subr.bf16.mxu0 0
    %418 = vmatpush1.bf16.msra.mxu0 %v168
    %419 = vmatprep.subr.bf16.mxu0 0
    %420 = vmatpush1.bf16.msra.mxu0 %v169
    %421 = vmatprep.subr.bf16.mxu0 0
    %422 = vmatpush1.bf16.msra.mxu0 %v170
    %423 = vmatprep.subr.bf16.mxu0 0
    %424 = vmatpush1.bf16.msra.mxu0 %v171
    %425 = vmatprep.subr.bf16.mxu0 0
    %426 = vmatpush1.bf16.msra.mxu0 %v172
    %427 = vmatprep.subr.bf16.mxu0 0
    %428 = vmatpush1.bf16.msra.mxu0 %v173
    %429 = vmatprep.subr.bf16.mxu0 0
    %430 = vmatpush1.bf16.msra.mxu0 %v174
    %431 = vmatprep.subr.bf16.mxu0 0
    %432 = vmatpush1.bf16.msra.mxu0 %v175
    %433 = vmatprep.subr.bf16.mxu0 0
    %434 = vmatpush1.bf16.msra.mxu0 0
    %435 = vmatprep.subr.bf16.mxu0 0
    %436 = vmatpush1.bf16.msra.mxu0 0
    %437 = vmatprep.subr.bf16.mxu0 0
    %438 = vmatpush1.bf16.msra.mxu0 0
    %439 = vmatprep.subr.bf16.mxu0 0
    %440 = vmatpush1.bf16.msra.mxu0 0
    %441 = vmatprep.subr.bf16.mxu0 0
    %442 = vmatpush1.bf16.msra.mxu0 0
    %443 = vmatprep.subr.bf16.mxu0 0
    %444 = vmatpush1.bf16.msra.mxu0 0
    %445 = vmatprep.subr.bf16.mxu0 0
    %446 = vmatpush1.bf16.msra.mxu0 0
    %447 = vmatprep.subr.bf16.mxu0 0
    %448 = vmatpush1.bf16.msra.mxu0 0
    %449 = vmatprep.mubr.bf16.mxu0 0
    %450 = vmatmul.mubr.bf16.gmra.mrb[0].mxu0 %v416
    %v451 = vpop.f32.mrb[0].mxu0
    %v452 = vadd.f32 0.0, %v451
    %v453 = vpop.f32.mrb[0].mxu0
    %v454 = vpop.f32.mrb[0].mxu0
    %v455 = vpop.f32.mrb[0].mxu0
    %456 = vdwg.mxu0
    %v458 = vrot.slane %v452, 6
    %v460 = vadd.f32 %v117, %v458
    %v461 = vpack.c.bf16 %v460, %v460
    %v462 = vtanh.bf16.pop %v461
    %v464 = vrot.slane %v462, 1
    %466 = vmatprep.subr.bf16.mxu0 0
    %467 = vmatpush1.bf16.msra.mxu0 %v168
    %468 = vmatprep.subr.bf16.mxu0 0
    %469 = vmatpush1.bf16.msra.mxu0 %v169
    %470 = vmatprep.subr.bf16.mxu0 0
    %471 = vmatpush1.bf16.msra.mxu0 %v170
    %472 = vmatprep.subr.bf16.mxu0 0
    %473 = vmatpush1.bf16.msra.mxu0 %v171
    %474 = vmatprep.subr.bf16.mxu0 0
    %475 = vmatpush1.bf16.msra.mxu0 %v172
    %476 = vmatprep.subr.bf16.mxu0 0
    %477 = vmatpush1.bf16.msra.mxu0 %v173
    %478 = vmatprep.subr.bf16.mxu0 0
    %479 = vmatpush1.bf16.msra.mxu0 %v174
    %480 = vmatprep.subr.bf16.mxu0 0
    %481 = vmatpush1.bf16.msra.mxu0 %v175
    %482 = vmatprep.subr.bf16.mxu0 0
    %483 = vmatpush1.bf16.msra.mxu0 0
    %484 = vmatprep.subr.bf16.mxu0 0
    %485 = vmatpush1.bf16.msra.mxu0 0
    %486 = vmatprep.subr.bf16.mxu0 0
    %487 = vmatpush1.bf16.msra.mxu0 0
    %488 = vmatprep.subr.bf16.mxu0 0
    %489 = vmatpush1.bf16.msra.mxu0 0
    %490 = vmatprep.subr.bf16.mxu0 0
    %491 = vmatpush1.bf16.msra.mxu0 0
    %492 = vmatprep.subr.bf16.mxu0 0
    %493 = vmatpush1.bf16.msra.mxu0 0
    %494 = vmatprep.subr.bf16.mxu0 0
    %495 = vmatpush1.bf16.msra.mxu0 0
    %496 = vmatprep.subr.bf16.mxu0 0
    %497 = vmatpush1.bf16.msra.mxu0 0
    %498 = vmatprep.mubr.bf16.mxu0 0
    %499 = vmatmul.mubr.bf16.gmra.mrb[0].mxu0 %v464
    %v500 = vpop.f32.mrb[0].mxu0
    %v501 = vadd.f32 0.0, %v500
    %v502 = vpop.f32.mrb[0].mxu0
    %v503 = vpop.f32.mrb[0].mxu0
    %v504 = vpop.f32.mrb[0].mxu0
    %505 = vdwg.mxu0
    %v507 = vrot.slane %v501, 4
    %v509 = vadd.f32 %v117, %v507
    %v510 = vpack.c.bf16 %v509, %v509
    %v511 = vtanh.bf16.pop %v510
    %v513 = vrot.slane %v511, 2
    %515 = vmatprep.subr.bf16.mxu0 0
    %516 = vmatpush1.bf16.msra.mxu0 %v168
    %517 = vmatprep.subr.bf16.mxu0 0
    %518 = vmatpush1.bf16.msra.mxu0 %v169
    %519 = vmatprep.subr.bf16.mxu0 0
    %520 = vmatpush1.bf16.msra.mxu0 %v170
    %521 = vmatprep.subr.bf16.mxu0 0
    %522 = vmatpush1.bf16.msra.mxu0 %v171
    %523 = vmatprep.subr.bf16.mxu0 0
    %524 = vmatpush1.bf16.msra.mxu0 %v172
    %525 = vmatprep.subr.bf16.mxu0 0
    %526 = vmatpush1.bf16.msra.mxu0 %v173
    %527 = vmatprep.subr.bf16.mxu0 0
    %528 = vmatpush1.bf16.msra.mxu0 %v174
    %529 = vmatprep.subr.bf16.mxu0 0
    %530 = vmatpush1.bf16.msra.mxu0 %v175
    %531 = vmatprep.subr.bf16.mxu0 0
    %532 = vmatpush1.bf16.msra.mxu0 0
    %533 = vmatprep.subr.bf16.mxu0 0
    %534 = vmatpush1.bf16.msra.mxu0 0
    %535 = vmatprep.subr.bf16.mxu0 0
    %536 = vmatpush1.bf16.msra.mxu0 0
    %537 = vmatprep.subr.bf16.mxu0 0
    %538 = vmatpush1.bf16.msra.mxu0 0
    %539 = vmatprep.subr.bf16.mxu0 0
    %540 = vmatpush1.bf16.msra.mxu0 0
    %541 = vmatprep.subr.bf16.mxu0 0
    %542 = vmatpush1.bf16.msra.mxu0 0
    %543 = vmatprep.subr.bf16.mxu0 0
    %544 = vmatpush1.bf16.msra.mxu0 0
    %545 = vmatprep.subr.bf16.mxu0 0
    %546 = vmatpush1.bf16.msra.mxu0 0
    %547 = vmatprep.mubr.bf16.mxu0 0
    %548 = vmatmul.mubr.bf16.gmra.mrb[0].mxu0 %v513
    %v549 = vpop.f32.mrb[0].mxu0
    %v550 = vadd.f32 0.0, %v549
    %v551 = vpop.f32.mrb[0].mxu0
    %v552 = vpop.f32.mrb[0].mxu0
    %v553 = vpop.f32.mrb[0].mxu0
    %554 = vdwg.mxu0
    %v556 = vrot.slane %v550, 2
    %v558 = vadd.f32 %v117, %v556
    %v559 = vpack.c.bf16 %v558, %v558
    %v560 = vtanh.bf16.pop %v559
    %v561 = vld [vmem:[#allocation5] sm:$0xf]
    %v562 = vld [vmem:[#allocation5 + $0x4] sm:$0xf]
    %v563 = vld [vmem:[#allocation5 + $0x8] sm:$0xf]
    %v564 = vld [vmem:[#allocation5 + $0xc] sm:$0xf]
    %v565 = vld [vmem:[#allocation5 + $0x10] sm:$0xf]
    %v566 = vld [vmem:[#allocation5 + $0x14] sm:$0xf]
    %v567 = vld [vmem:[#allocation5 + $0x18] sm:$0xf]
    %v568 = vld [vmem:[#allocation5 + $0x1c] sm:$0xf]
    %v569 = vld [vmem:[#allocation5 + $0x20] sm:$0xf]
    %v570 = vld [vmem:[#allocation5 + $0x24] sm:$0xf]
    %v571 = vld [vmem:[#allocation5 + $0x28] sm:$0xf]
    %v572 = vld [vmem:[#allocation5 + $0x2c] sm:$0xf]
    %v573 = vld [vmem:[#allocation5 + $0x30] sm:$0xf]
    %v574 = vld [vmem:[#allocation5 + $0x34] sm:$0xf]
    %v575 = vld [vmem:[#allocation5 + $0x38] sm:$0xf]
    %v576 = vld [vmem:[#allocation5 + $0x3c] sm:$0xf]
    %v577 = vld [vmem:[%s5] sm:$0x1]
    %v579 = vlaneseq
    %v580 = vshrl.u32 %v579, 7
    %v581 = vsub.s32 0, %v580
    %v582 = vrot.slane %v577, %v581
    %v585 = vrot.slane %v560, 3
    %v603 = vunpack.c.l.b16 %v561
    %v604 = vunpack.c.l.b16 %v562
    %v605 = vunpack.c.l.b16 %v563
    %v606 = vunpack.c.l.b16 %v564
    %v607 = vunpack.c.l.b16 %v565
    %v608 = vunpack.c.l.b16 %v566
    %v609 = vunpack.c.l.b16 %v567
    %v610 = vunpack.c.l.b16 %v568
    %v611 = vunpack.c.l.b16 %v569
    %v612 = vunpack.c.l.b16 %v570
    %v613 = vunpack.c.l.b16 %v571
    %v614 = vunpack.c.l.b16 %v572
    %v615 = vunpack.c.l.b16 %v573
    %v616 = vunpack.c.l.b16 %v574
    %v617 = vunpack.c.l.b16 %v575
    %v618 = vunpack.c.l.b16 %v576
    %v619 = vpack.c.b16 %v604, %v603
    %v620 = vpack.c.b16 %v606, %v605
    %v621 = vpack.c.b16 %v608, %v607
    %v622 = vpack.c.b16 %v610, %v609
    %v623 = vpack.c.b16 %v612, %v611
    %v624 = vpack.c.b16 %v614, %v613
    %v625 = vpack.c.b16 %v616, %v615
    %v626 = vpack.c.b16 %v618, %v617
    %635 = vmatprep.subr.bf16.mxu0 0
    %636 = vmatpush1.bf16.msra.mxu0 %v619
    %637 = vmatprep.subr.bf16.mxu0 0
    %638 = vmatpush1.bf16.msra.mxu0 %v620
    %639 = vmatprep.subr.bf16.mxu0 0
    %640 = vmatpush1.bf16.msra.mxu0 %v621
    %641 = vmatprep.subr.bf16.mxu0 0
    %642 = vmatpush1.bf16.msra.mxu0 %v622
    %643 = vmatprep.subr.bf16.mxu0 0
    %644 = vmatpush1.bf16.msra.mxu0 %v623
    %645 = vmatprep.subr.bf16.mxu0 0
    %646 = vmatpush1.bf16.msra.mxu0 %v624
    %647 = vmatprep.subr.bf16.mxu0 0
    %648 = vmatpush1.bf16.msra.mxu0 %v625
    %649 = vmatprep.subr.bf16.mxu0 0
    %650 = vmatpush1.bf16.msra.mxu0 %v626
    %651 = vmatprep.subr.bf16.mxu0 0
    %652 = vmatpush1.bf16.msra.mxu0 0
    %653 = vmatprep.subr.bf16.mxu0 0
    %654 = vmatpush1.bf16.msra.mxu0 0
    %655 = vmatprep.subr.bf16.mxu0 0
    %656 = vmatpush1.bf16.msra.mxu0 0
    %657 = vmatprep.subr.bf16.mxu0 0
    %658 = vmatpush1.bf16.msra.mxu0 0
    %659 = vmatprep.subr.bf16.mxu0 0
    %660 = vmatpush1.bf16.msra.mxu0 0
    %661 = vmatprep.subr.bf16.mxu0 0
    %662 = vmatpush1.bf16.msra.mxu0 0
    %663 = vmatprep.subr.bf16.mxu0 0
    %664 = vmatpush1.bf16.msra.mxu0 0
    %665 = vmatprep.subr.bf16.mxu0 0
    %666 = vmatpush1.bf16.msra.mxu0 0
    %667 = vmatprep.mubr.bf16.mxu0 0
    %668 = vmatmul.mubr.bf16.gmra.mrb[0].mxu0 %v585
    %v669 = vpop.f32.mrb[0].mxu0
    %v670 = vadd.f32 %v582, %v669
    %v671 = vpop.f32.mrb[0].mxu0
    %v672 = vpop.f32.mrb[0].mxu0
    %v673 = vpop.f32.mrb[0].mxu0
    %674 = vdwg.mxu0
    %675 = vst [vmem:[#allocation7] sm:$0x3] %v670
    // Predicated region
    $region34: #{encoder_forward.1} parent=1 // pred_check
      _
    $region35: #{encoder_forward.1} parent=1 // pred_check_branch
      %677 = sbr.rel (0) target = $region37
    $region36: #{encoder_forward.1} parent=1 // pred_region
      %s679 = ssub.s32 32, 32
      %680 = vsyncadd [#allocation4], %s679
      %s682 = sshll.u32 [#allocation7], 4
      %s683 = int_to_ptr.vmem [resolvable:$true] %s682
      %685 = dma.vmem_to_hbm [thread:$0]  %s683, 32, %s6, [#allocation4]
    $region37: #{encoder_forward.1} parent=1 // pred_fallthru
      _
    // Predicated region
    $region38: #{encoder_forward.1} parent=1 // pred_check
      _
    $region39: #{encoder_forward.1} parent=1 // pred_check_branch
      %687 = sbr.rel (0) target = $region41
    $region40: #{encoder_forward.1} parent=1 // pred_region
      %688 = dma.done [#allocation4], 32
    $region41: #{encoder_forward.1} parent=1 // pred_fallthru
      _
    %689 = vsyncpa [#allocation3], 1
    %690 = vsyncpa [#allocation6], 1
    %691 = vsyncpa [#allocation4], 1

</llo_original>
